<compile_context>
chip_gen: v5e
topology: v5e:2x2
jax: 0.10.0
libtpu: 0.0.40
codegen_flags: <defaults>
</compile_context>

<pallas_src>
import functools

import numpy as np
import jax
import jax.numpy as jnp
from jax import lax
from jax.experimental import pallas as pl
from jax.experimental.pallas import tpu as pltpu

LN_EPS = 1e-5        # torch.nn.LayerNorm default eps
GEN_EPS = 1e-7       # GENConv message eps
MASK_NEG = 1e30      # additive mask pushing padded neighbor slots to -inf-ish
VMEM_LIMIT = 48 * 1024 * 1024   # sized against v7x's 64 MiB VMEM


def _layernorm(x, gamma, beta):
  """Per-row LayerNorm over the feature (last) dim, elementwise affine (f32)."""
  mu = jnp.mean(x, axis=-1, keepdims=True)
  var = jnp.mean((x - mu) ** 2, axis=-1, keepdims=True)
  return (x - mu) * lax.rsqrt(var + LN_EPS) * gamma + beta


# ----------------------------------------------------------------------------
# Row-tiled Linear:  y = x @ W + b   (bf16 MXU operands, f32 accumulate)
# ----------------------------------------------------------------------------
def _linear_kernel(x_ref, w_ref, b_ref, o_ref):
  o_ref[...] = (
      jnp.dot(x_ref[...].astype(jnp.bfloat16), w_ref[...],
              preferred_element_type=jnp.float32)
      + b_ref[...])


def _pick_rows(n):
  for c in (512, 256, 128, 64, 32, 16, 8):
    if n % c == 0:
      return c
  return n


def tiled_linear(x, w, b):
  rows, f = x.shape
  h = w.shape[1]
  tr = _pick_rows(rows)
  return pl.pallas_call(
      _linear_kernel,
      out_shape=jax.ShapeDtypeStruct((rows, h), jnp.float32),
      grid=(rows // tr,),
      in_specs=[pl.BlockSpec((tr, f), lambda i: (i, 0)),
                pl.BlockSpec((f, h), lambda i: (0, 0)),
                pl.BlockSpec((1, h), lambda i: (0, 0))],
      out_specs=pl.BlockSpec((tr, h), lambda i: (i, 0)),
      compiler_params=pltpu.CompilerParams(
          dimension_semantics=("parallel",),
          vmem_limit_bytes=VMEM_LIMIT),
  )(x, w, b)


# ----------------------------------------------------------------------------
# Final head: layers[0].norm -> ReLU -> (dropout=id at eval) -> Linear (padded)
# ----------------------------------------------------------------------------
def _final_kernel(x_ref, g_ref, b_ref, w_ref, bias_ref, o_ref):
  h = jnp.maximum(_layernorm(x_ref[...], g_ref[...], b_ref[...]), 0.0)
  o_ref[...] = (
      jnp.dot(h.astype(jnp.bfloat16), w_ref[...],
              preferred_element_type=jnp.float32)
      + bias_ref[...])


def final_head(x, ln_g, ln_b, w, b):
  rows, hdim = x.shape
  out_pad = w.shape[1]
  tr = _pick_rows(rows)
  return pl.pallas_call(
      _final_kernel,
      out_shape=jax.ShapeDtypeStruct((rows, out_pad), jnp.float32),
      grid=(rows // tr,),
      in_specs=[pl.BlockSpec((tr, hdim), lambda i: (i, 0)),
                pl.BlockSpec((1, hdim), lambda i: (0, 0)),
                pl.BlockSpec((1, hdim), lambda i: (0, 0)),
                pl.BlockSpec((hdim, out_pad), lambda i: (0, 0)),
                pl.BlockSpec((1, out_pad), lambda i: (0, 0))],
      out_specs=pl.BlockSpec((tr, out_pad), lambda i: (i, 0)),
      compiler_params=pltpu.CompilerParams(
          dimension_semantics=("parallel",),
          vmem_limit_bytes=VMEM_LIMIT),
  )(x, ln_g, ln_b, w, b)


# ----------------------------------------------------------------------------
# Fused DeepGCN layers: grid = (num_layers,), node state resident in VMEM.
# ----------------------------------------------------------------------------
def _gnn_layers_kernel(n_nodes, deg_pad, hidden,
                       slot_src_ref,                        # SMEM [N*D] int32
                       x0_ref, ea_ref, negb_ref, hase_ref, t_ref,
                       ln_g_ref, ln_b_ref,
                       w1_ref, b1_ref, g1_ref, be1_ref, w2_ref, b2_ref,
                       o_ref,
                       x_scr, h_scr, msg_scr):
  l = pl.program_id(0)
  n_slots = n_nodes * deg_pad

  # Layer 0 consumes the encoder output: copy it into the resident VMEM state.
  @pl.when(l == 0)
  def _():
    x_scr[...] = x0_ref[...]

  x = x_scr[...]                                             # [N, H] f32
  is_first = (l == 0).astype(jnp.float32)

  # DeepGCNLayer 'res+' pre-block: h = relu(LayerNorm(x)); layer 0 is the bare
  # conv (no norm/act); dropout(p=0.1) is identity at eval.
  h_pre = jnp.maximum(_layernorm(x, ln_g_ref[...], ln_b_ref[...]), 0.0)
  h = x * is_first + h_pre * (1.0 - is_first)
  h_scr[...] = h

  # ---- index-driven gather: x_j = h[src] for every padded neighbor slot ----
  def gather8(blk, carry):
    base = blk * 8
    for j in range(8):                                       # static unroll x8
      s = base + j
      src = slot_src_ref[s]
      msg_scr[pl.ds(s, 1), :] = h_scr[pl.ds(src, 1), :]
    return carry

  lax.fori_loop(0, n_slots // 8, gather8, 0)

  # ---- GENConv message + per-destination softmax aggregation ---------------
  # msg_e = relu(x_src + edge_attr_e) + eps ; softmax over neighbor slots with
  # learnable temperature t, max-subtracted for numerical stability.
  msg = jnp.maximum(msg_scr[...] + ea_ref[...], 0.0) + GEN_EPS      # [N*D, H]
  scaled = msg * t_ref[...] - negb_ref[...]        # padded slots -> ~ -1e30
  msg3 = msg.reshape(n_nodes, deg_pad, hidden)
  sc3 = scaled.reshape(n_nodes, deg_pad, hidden)
  mx = jnp.max(sc3, axis=1, keepdims=True)         # per-dst, per-channel max
  ex = jnp.exp(sc3 - mx)                           # padded slots -> exactly 0
  num = jnp.sum(ex * msg3, axis=1)                 # [N, H]
  den = jnp.sum(ex, axis=1)                        # [N, H], >= 1 always
  agg = num * pl.reciprocal(den, approx=True) * hase_ref[...]   # isolated -> 0

  out = agg + h                                    # GENConv skip (+ x_dst)

  # ---- GENConv MLP: Linear(H,2H) -> LayerNorm -> ReLU -> Linear(2H,H) ------
  h1 = jnp.dot(out.astype(jnp.bfloat16), w1_ref[...],
               preferred_element_type=jnp.float32) + b1_ref[...]
  h1 = jnp.maximum(_layernorm(h1, g1_ref[...], be1_ref[...]), 0.0)
  h2 = jnp.dot(h1.astype(jnp.bfloat16), w2_ref[...],
               preferred_element_type=jnp.float32) + b2_ref[...]

  new_x = h2 + x * (1.0 - is_first)                # 'res+' residual (layers>0)
  x_scr[...] = new_x
  o_ref[...] = new_x


def gnn_layers(x0, ea_slot, neg_bias, has_edge, slot_src, lp, *, deg_pad):
  n, h = x0.shape
  nd = ea_slot.shape[0]
  num_layers = lp["w1"].shape[0]

  cost = pl.CostEstimate(
      flops=num_layers * (8 * n * h * h + 12 * nd * h),
      transcendentals=num_layers * (nd * h + 2 * n * h),
      bytes_accessed=4 * (2 * n * h + nd * h + nd + n)
      + num_layers * (8 * h * h + 64 * h),
  )

  grid_spec = pltpu.PrefetchScalarGridSpec(
      num_scalar_prefetch=1,                      # slot->src table in SMEM
      grid=(num_layers,),
      in_specs=[
          pl.BlockSpec((n, h), lambda l, *_: (0, 0)),              # x0
          pl.BlockSpec((nd, h), lambda l, *_: (0, 0)),             # ea_slot
          pl.BlockSpec((nd, 1), lambda l, *_: (0, 0)),             # neg_bias
          pl.BlockSpec((n, 1), lambda l, *_: (0, 0)),              # has_edge
          pl.BlockSpec((None, 1, 1), lambda l, *_: (l, 0, 0)),     # t
          pl.BlockSpec((None, 1, h), lambda l, *_: (l, 0, 0)),     # ln_g
          pl.BlockSpec((None, 1, h), lambda l, *_: (l, 0, 0)),     # ln_b
          pl.BlockSpec((None, h, 2 * h), lambda l, *_: (l, 0, 0)),  # w1 (bf16)
          pl.BlockSpec((None, 1, 2 * h), lambda l, *_: (l, 0, 0)),  # b1
          pl.BlockSpec((None, 1, 2 * h), lambda l, *_: (l, 0, 0)),  # g1
          pl.BlockSpec((None, 1, 2 * h), lambda l, *_: (l, 0, 0)),  # be1
          pl.BlockSpec((None, 2 * h, h), lambda l, *_: (l, 0, 0)),  # w2 (bf16)
          pl.BlockSpec((None, 1, h), lambda l, *_: (l, 0, 0)),      # b2
      ],
      out_specs=pl.BlockSpec((n, h), lambda l, *_: (0, 0)),
      scratch_shapes=[
          pltpu.VMEM((n, h), jnp.float32),     # x: residual state across layers
          pltpu.VMEM((n, h), jnp.float32),     # h: pre-normed conv input
          pltpu.VMEM((nd, h), jnp.float32),    # gathered x_j / message buffer
      ],
  )

  # TODO(synk): for graphs whose [N,H] / [N*D,H] buffers exceed VMEM (true
  # ogbn-proteins scale), additionally tile nodes and edge-slot blocks and run
  # one pallas_call per layer instead of keeping the full state resident.
  kern = functools.partial(_gnn_layers_kernel, n, deg_pad, h)
  return pl.pallas_call(
      kern,
      out_shape=jax.ShapeDtypeStruct((n, h), jnp.float32),
      grid_spec=grid_spec,
      compiler_params=pltpu.CompilerParams(
          dimension_semantics=("arbitrary",),       # layers are sequential
          vmem_limit_bytes=VMEM_LIMIT),
      cost_estimate=cost,
  )(slot_src, x0, ea_slot, neg_bias, has_edge,
    lp["t"], lp["ln_g"], lp["ln_b"], lp["w1"], lp["b1"], lp["g1"], lp["be1"],
    lp["w2"], lp["b2"])


# ----------------------------------------------------------------------------
# Full forward
# ----------------------------------------------------------------------------
def deeper_gcn_forward(x, edge_attr_slot, slot_src, neg_bias, has_edge,
                       params, *, deg_pad, out_dim):
  h0 = tiled_linear(x, params["node_w"], params["node_b"])        # node_encoder
  ea = tiled_linear(edge_attr_slot, params["edge_w"], params["edge_b"])
  hx = gnn_layers(h0, ea, neg_bias, has_edge, slot_src,
                  params["layers"], deg_pad=deg_pad)
  lp = params["layers"]
  out = final_head(hx, lp["ln_g"][0], lp["ln_b"][0],
                   params["lin_w"], params["lin_b"])
  return out[:, :out_dim]


# ----------------------------------------------------------------------------
# Host-side graph preprocessing: sort by destination, pad to fixed degree.
# ----------------------------------------------------------------------------
def build_padded_neighbors(src, dst, edge_attr, num_nodes):
  src = np.asarray(src, dtype=np.int64)
  dst = np.asarray(dst, dtype=np.int64)
  ea = np.asarray(edge_attr, dtype=np.float32)
  e = src.shape[0]

  order = np.argsort(dst, kind="stable")            # edges sorted by dst
  src_s, dst_s, ea_s = src[order], dst[order], ea[order]

  counts = np.bincount(dst_s, minlength=num_nodes)
  max_deg = int(counts.max()) if e > 0 else 0
  deg_pad = max(8, ((max_deg + 7) // 8) * 8)         # multiple of 8 sublanes

  starts = np.concatenate([[0], np.cumsum(counts)[:-1]])
  rank = np.arange(e) - starts[dst_s]
  slot = dst_s * deg_pad + rank                      # unique slot per edge

  nd = num_nodes * deg_pad
  slot_src = np.zeros((nd,), np.int32)
  slot_src[slot] = src_s
  slot_mask = np.zeros((nd,), np.float32)
  slot_mask[slot] = 1.0
  ea_slot = np.zeros((nd, ea.shape[1]), np.float32)
  ea_slot[slot] = ea_s

  neg_bias = ((1.0 - slot_mask) * MASK_NEG).reshape(nd, 1).astype(np.float32)
  has_edge = (counts > 0).astype(np.float32).reshape(num_nodes, 1)

  return (jnp.asarray(slot_src), jnp.asarray(ea_slot),
          jnp.asarray(neg_bias), jnp.asarray(has_edge), deg_pad)


# ----------------------------------------------------------------------------
# Deterministic parameter construction
# ----------------------------------------------------------------------------
def init_params(key, node_f, edge_f, hidden, out_dim, out_pad, num_layers):
  def nrm(k, shape, scale=0.1):
    return (scale * jax.random.normal(k, shape)).astype(jnp.float32)

  ks = jax.random.split(key, 15)
  h, L = hidden, num_layers

  lin_w = jnp.zeros((h, out_pad), jnp.float32).at[:, :out_dim].set(
      nrm(ks[4], (h, out_dim)))
  lin_b = jnp.zeros((1, out_pad), jnp.float32).at[:, :out_dim].set(
      nrm(ks[5], (1, out_dim)))

  return {
      # encoders + final head (matmul weights stored bf16 for the MXU)
      "node_w": nrm(ks[0], (node_f, h)).astype(jnp.bfloat16),
      "node_b": nrm(ks[1], (1, h)),
      "edge_w": nrm(ks[2], (edge_f, h)).astype(jnp.bfloat16),
      "edge_b": nrm(ks[3], (1, h)),
      "lin_w": lin_w.astype(jnp.bfloat16),
      "lin_b": lin_b,
      # per-layer parameters, stacked on a leading layer axis and streamed
      # into VMEM one layer at a time by the fused kernel's grid.
      "layers": {
          "t":    jnp.ones((L, 1, 1), jnp.float32),            # learn_t = 1.0
          "ln_g": 1.0 + nrm(ks[6], (L, 1, h)),                 # DeepGCNLayer LN
          "ln_b": nrm(ks[7], (L, 1, h)),
          "w1":   nrm(ks[8], (L, h, 2 * h)).astype(jnp.bfloat16),  # GENConv MLP
          "b1":   nrm(ks[9], (L, 1, 2 * h)),
          "g1":   1.0 + nrm(ks[10], (L, 1, 2 * h)),
          "be1":  nrm(ks[11], (L, 1, 2 * h)),
          "w2":   nrm(ks[12], (L, 2 * h, h)).astype(jnp.bfloat16),
          "b2":   nrm(ks[13], (L, 1, h)),
      },
  }


if __name__ == "__main__":
  # Small synthetic graph consistent with ogbn-proteins shapes:
  # node feats = 8, edge feats = 8, 112 output tasks.  Hidden = 128 (lane
  # dense), 3 DeepGCN layers.
  N, E = 64, 192
  NODE_F, EDGE_F = 8, 8
  HIDDEN = 128
  OUT_DIM = 112
  OUT_PAD = 128
  NUM_LAYERS = 3

  root = jax.random.PRNGKey(0)
  k_x, k_ea, k_src, k_dst, k_par = jax.random.split(root, 5)

  x = jax.random.normal(k_x, (N, NODE_F), dtype=jnp.float32)
  edge_attr = jax.random.normal(k_ea, (E, EDGE_F), dtype=jnp.float32)
  src = jax.random.randint(k_src, (E,), 0, N, dtype=jnp.int32)   # edge_index[0]
  dst = jax.random.randint(k_dst, (E,), 0, N, dtype=jnp.int32)   # edge_index[1]

  slot_src, ea_slot_raw, neg_bias, has_edge, deg_pad = build_padded_neighbors(
      src, dst, edge_attr, N)

  params = init_params(k_par, NODE_F, EDGE_F, HIDDEN, OUT_DIM, OUT_PAD,
                       NUM_LAYERS)

  out = deeper_gcn_forward(x, ea_slot_raw, slot_src, neg_bias, has_edge,
                           params, deg_pad=deg_pad, out_dim=OUT_DIM)
  jax.block_until_ready(out)
  assert out.shape == (N, OUT_DIM) and out.dtype == jnp.float32
  assert bool(jnp.all(jnp.isfinite(out)))
  print("KERNEL_OK")
</pallas_src>

<mosaic_0001>
module attributes {stable_mosaic.version = 11 : i64} {
  func.func @_linear_kernel(%arg0: i32, %arg1: memref<64x8xf32, #tpu.memory_space<vmem>>, %arg2: memref<8x128xbf16, #tpu.memory_space<vmem>>, %arg3: memref<1x128xf32, #tpu.memory_space<vmem>>, %arg4: memref<64x128xf32, #tpu.memory_space<vmem>>) attributes {dimension_semantics = [#tpu.dimension_semantics<parallel>], iteration_bounds = array<i64: 1>, scalar_prefetch = 0 : i64, scratch_operands = 0 : i64, tpu.core_type = #tpu.core_type<tc>, window_params = [{transform_indices = @transform_0, window_bounds = array<i64: 64, 8>}, {pipeline_mode = #tpu.pipeline_mode<synchronous>, transform_indices = @transform_1, window_bounds = array<i64: 8, 128>}, {pipeline_mode = #tpu.pipeline_mode<synchronous>, transform_indices = @transform_2, window_bounds = array<i64: 1, 128>}, {transform_indices = @transform_3, window_bounds = array<i64: 64, 128>}]} {
    %c0 = arith.constant 0 : index
    %c0_0 = arith.constant 0 : index
    %0 = vector.load %arg1[%c0, %c0_0] : memref<64x8xf32, #tpu.memory_space<vmem>>, vector<64x8xf32>
    %1 = arith.truncf %0 : vector<64x8xf32> to vector<64x8xbf16>
    %c0_1 = arith.constant 0 : index
    %c0_2 = arith.constant 0 : index
    %2 = vector.load %arg2[%c0_1, %c0_2] : memref<8x128xbf16, #tpu.memory_space<vmem>>, vector<8x128xbf16>
    %cst = arith.constant dense<0.000000e+00> : vector<64x128xf32>
    %3 = tpu.matmul %1, %2, %cst {dimension_numbers = #tpu.dot_dimension_numbers<[1], [0], [0], [1], [0, 0, 1, 1], [], []>} : vector<64x8xbf16>, vector<8x128xbf16>, vector<64x128xf32> -> vector<64x128xf32>
    %c0_3 = arith.constant 0 : index
    %c0_4 = arith.constant 0 : index
    %4 = vector.load %arg3[%c0_3, %c0_4] : memref<1x128xf32, #tpu.memory_space<vmem>>, vector<1x128xf32>
    %5 = vector.broadcast %4 : vector<1x128xf32> to vector<64x128xf32>
    %6 = arith.addf %3, %5 : vector<64x128xf32>
    %c0_5 = arith.constant 0 : index
    %c0_6 = arith.constant 0 : index
    %7 = vector.load %arg4[%c0_5, %c0_6] : memref<64x128xf32, #tpu.memory_space<vmem>>, vector<64x128xf32>
    tpu.vector_store %arg4[%c0_5, %c0_6], %6 {strides = array<i32>} : memref<64x128xf32, #tpu.memory_space<vmem>>, vector<64x128xf32>,
    return
  }
  func.func @transform_0(%arg0: i32) -> (i32, i32) {
    %c0_i32 = arith.constant 0 : i32
    %c0_i32_0 = arith.constant 0 : i32
    return %arg0, %c0_i32 : i32, i32
  }
  func.func @transform_1(%arg0: i32) -> (i32, i32) {
    %c0_i32 = arith.constant 0 : i32
    %c0_i32_0 = arith.constant 0 : i32
    %c0_i32_1 = arith.constant 0 : i32
    return %c0_i32, %c0_i32_0 : i32, i32
  }
  func.func @transform_2(%arg0: i32) -> (i32, i32) {
    %c0_i32 = arith.constant 0 : i32
    %c0_i32_0 = arith.constant 0 : i32
    %c0_i32_1 = arith.constant 0 : i32
    return %c0_i32, %c0_i32_0 : i32, i32
  }
  func.func @transform_3(%arg0: i32) -> (i32, i32) {
    %c0_i32 = arith.constant 0 : i32
    %c0_i32_0 = arith.constant 0 : i32
    return %arg0, %c0_i32 : i32, i32
  }
}

</mosaic_0001>

<llo_original>
// kernel: tpu_custom_call.1
$region0: #{tpu_custom_call.1}
  #allocation0 [shape = 'u32[]', space=smem, size = 0x4, offset = 0x4, fixed_abs, tag = 'smem constant byte address 0x4 - core index']
  #allocation1 [shape = 'u32[72,128]{1,0:T(1,128)}', space=vmem, size = 0x9000, scoped, tag = 'internal scratch']
  %s0 = inlined_call_operand.vmem [shape: f32[64,8], index: 0, kind: input, shape index: {}]
  %s1 = inlined_call_operand.vmem [shape: bf16[8,128], index: 1, kind: input, shape index: {}]
  %s2 = inlined_call_operand.vmem [shape: f32[1,128], index: 2, kind: input, shape index: {}]
  %s3 = inlined_call_operand.hbm [shape: f32[64,128], index: 3, kind: output, shape index: {}]
  %s4 = sld [smem:[#allocation0]]
  $region22: #{tpu_custom_call.1} parent=0
    _
  %s6 = ssub.s32 1, %s4
  %s7 = scalar_select 0, %s6, %s4
  $region1: #{tpu_custom_call.1} parent=0
    #allocation2 [shape = 'u8[32768]{0}', space=vmem, size = 0x8000, scoped, tag = 'output window, operand 0, single buffered']
    #allocation3 [shape = 's32[1]{0}', space=sflag, size = 0x4, scoped, tag = 'scoped memory for tpu_custom_call.1']
    %8 = vsyncpa [#allocation3], 0
    // Predicated region
    $region2: #{tpu_custom_call.1} parent=1 // pred_check
      _
    $region3: #{tpu_custom_call.1} parent=1 // pred_check_branch
      %10 = sbr.rel (0) target = $region5
    $region4: #{tpu_custom_call.1} parent=1 // pred_region
      _
    $region5: #{tpu_custom_call.1} parent=1 // pred_fallthru
      _
    // Predicated region
    $region6: #{tpu_custom_call.1} parent=1 // pred_check
      _
    $region7: #{tpu_custom_call.1} parent=1 // pred_check_branch
      %12 = sbr.rel (0) target = $region9
    $region8: #{tpu_custom_call.1} parent=1 // pred_region
      _
    $region9: #{tpu_custom_call.1} parent=1 // pred_fallthru
      _
    // Predicated region
    $region10: #{tpu_custom_call.1} parent=1 // pred_check
      _
    $region11: #{tpu_custom_call.1} parent=1 // pred_check_branch
      %14 = sbr.rel (0) target = $region13
    $region12: #{tpu_custom_call.1} parent=1 // pred_region
      _
    $region13: #{tpu_custom_call.1} parent=1 // pred_fallthru
      _
    %v16 = vld [vmem:[%s0] sm:$0xff]
    %v17 = vld [vmem:[%s0 + $0x8] sm:$0xff]
    %v18 = vld [vmem:[%s0 + $0x10] sm:$0xff]
    %v19 = vld [vmem:[%s0 + $0x18] sm:$0xff]
    %v20 = vld [vmem:[%s0 + $0x20] sm:$0xff]
    %v21 = vld [vmem:[%s0 + $0x28] sm:$0xff]
    %v22 = vld [vmem:[%s0 + $0x30] sm:$0xff]
    %v23 = vld [vmem:[%s0 + $0x38] sm:$0xff]
    %v24 = vpack.c.bf16 %v17, %v16
    %v25 = vpack.c.bf16 %v19, %v18
    %v26 = vpack.c.bf16 %v21, %v20
    %v27 = vpack.c.bf16 %v23, %v22
    %v28 = vld [vmem:[%s1] sm:$0xf]
    %v29 = vld [vmem:[%s2] sm:$0x1]
    %v31 = vperm.slane %v29, 0
    %vm33 = vcmask 64512
    %v35 = vsel %vm33, %v24, 0
    %v38 = vsel %vm33, %v25, 0
    %v41 = vsel %vm33, %v26, 0
    %v44 = vsel %vm33, %v27, 0
    %vm46 = vcmask 1043456
    %v48 = vsel %vm46, %v28, 0
    %50 = vmatpush.bf16.msra.mxu0 0
    %51 = vmatpush.bf16.msra.mxu0 0
    %52 = vmatpush.bf16.msra.mxu0 0
    %53 = vmatpush.bf16.msra.mxu0 0
    %54 = vmatpush.bf16.msra.mxu0 0
    %55 = vmatpush.bf16.msra.mxu0 0
    %56 = vmatpush.bf16.msra.mxu0 0
    %57 = vmatpush.bf16.msra.mxu0 %v48
    %58 = vmatmul.bf16.gmra.mxu0 %v35
    %v59 = vpop.f32.mrf.mxu0
    %v60 = vadd.f32 %v31, %v59
    %v61 = vpop.f32.mrf.mxu0
    %v62 = vadd.f32 %v31, %v61
    %63 = vmatmul.bf16.gmra.mxu0 %v38
    %v64 = vpop.f32.mrf.mxu0
    %v65 = vadd.f32 %v31, %v64
    %v66 = vpop.f32.mrf.mxu0
    %v67 = vadd.f32 %v31, %v66
    %68 = vmatmul.bf16.gmra.mxu0 %v41
    %v69 = vpop.f32.mrf.mxu0
    %v70 = vadd.f32 %v31, %v69
    %v71 = vpop.f32.mrf.mxu0
    %v72 = vadd.f32 %v31, %v71
    %73 = vmatmul.bf16.gmra.mxu0 %v44
    %v74 = vpop.f32.mrf.mxu0
    %v75 = vadd.f32 %v31, %v74
    %v76 = vpop.f32.mrf.mxu0
    %v77 = vadd.f32 %v31, %v76
    %78 = vdwg.mxu0
    %79 = vst [vmem:[#allocation2] sm:$0xff] %v60
    %80 = vst [vmem:[#allocation2 + $0x8] sm:$0xff] %v62
    %81 = vst [vmem:[#allocation2 + $0x10] sm:$0xff] %v65
    %82 = vst [vmem:[#allocation2 + $0x18] sm:$0xff] %v67
    %83 = vst [vmem:[#allocation2 + $0x20] sm:$0xff] %v70
    %84 = vst [vmem:[#allocation2 + $0x28] sm:$0xff] %v72
    %85 = vst [vmem:[#allocation2 + $0x30] sm:$0xff] %v75
    %86 = vst [vmem:[#allocation2 + $0x38] sm:$0xff] %v77
    // Predicated region
    $region14: #{tpu_custom_call.1} parent=1 // pred_check
      _
    $region15: #{tpu_custom_call.1} parent=1 // pred_check_branch
      %88 = sbr.rel (0) target = $region17
    $region16: #{tpu_custom_call.1} parent=1 // pred_region
      %90 = vsyncadd [#allocation3], 0
      %s91 = sshll.u32 [#allocation2], 4
      %s92 = int_to_ptr.vmem [resolvable:$true] %s91
      %s93 = sshll.u32 %s3, 4
      %s94 = int_to_ptr.hbm [resolvable:$true] %s93
      %99 = dma.vmem_to_hbm [thread:$0]  %s92, 1024, %s94, [#allocation3], 128, 128, 8
    $region17: #{tpu_custom_call.1} parent=1 // pred_fallthru
      _
    // Predicated region
    $region18: #{tpu_custom_call.1} parent=1 // pred_check
      _
    $region19: #{tpu_custom_call.1} parent=1 // pred_check_branch
      %101 = sbr.rel (0) target = $region21
    $region20: #{tpu_custom_call.1} parent=1 // pred_region
      %103 = dma.done [#allocation3], 1024
    $region21: #{tpu_custom_call.1} parent=1 // pred_fallthru
      _
    %104 = vsyncpa [#allocation3], 1

</llo_original>
